<compile_context>
chip_gen: v5e
topology: v5e:2x2
jax: 0.10.0
libtpu: 0.0.40
codegen_flags: <defaults>
</compile_context>

<pallas_src>
import jax
import jax.numpy as jnp
from jax.experimental import pallas as pl
from jax.experimental.pallas import tpu as pltpu


def _round_up(x: int, m: int) -> int:
    return ((x + m - 1) // m) * m


def _cdiv(a: int, b: int) -> int:
    return (a + b - 1) // b


# ---------------------------------------------------------------------------
# Kernels
# ---------------------------------------------------------------------------
def _ada_conv_kernel_fused_k(patches_ref, w_ref, b_ref, s_ref, o_ref):
    """Single full-K MXU pass for one (tm, tn) output tile."""
    acc = jnp.dot(patches_ref[...], w_ref[...],
                  preferred_element_type=jnp.float32)
    o_ref[...] = ((acc + b_ref[...]) * s_ref[...]).astype(o_ref.dtype)


def _ada_conv_kernel_split_k(patches_ref, w_ref, b_ref, s_ref, o_ref,
                             *acc_scratch):
    """K-tiled accumulation. If no scratch is passed (f32 output), the
    resident output block itself is the accumulator."""
    acc_ref = acc_scratch[0] if acc_scratch else o_ref
    k_idx = pl.program_id(2)

    @pl.when(k_idx == 0)
    def _init():
        acc_ref[...] = jnp.zeros_like(acc_ref)

    acc_ref[...] += jnp.dot(patches_ref[...], w_ref[...],
                            preferred_element_type=jnp.float32)

    @pl.when(k_idx == pl.num_programs(2) - 1)
    def _finalize():
        o_ref[...] = ((acc_ref[...] + b_ref[...]) * s_ref[...]
                      ).astype(o_ref.dtype)


# ---------------------------------------------------------------------------
# im2col (on bf16 input — single half-width materialization)
# ---------------------------------------------------------------------------
def _im2col(x, kernel_size, stride, padding, dilation):
    """x: (N, C, H, W) -> patches (N*H_out*W_out, C*k*k), plus (H_out, W_out)."""
    n, c, h, w = x.shape
    k = kernel_size
    eff_k = dilation * (k - 1) + 1
    h_out = (h + 2 * padding - eff_k) // stride + 1
    w_out = (w + 2 * padding - eff_k) // stride + 1

    x_pad = jnp.pad(x, ((0, 0), (0, 0), (padding, padding), (padding, padding)))

    cols = []
    for i in range(k):
        for j in range(k):
            hi = i * dilation
            wj = j * dilation
            patch = x_pad[:, :, hi:hi + stride * h_out:stride,
                                wj:wj + stride * w_out:stride]
            cols.append(patch)  # (N, C, H_out, W_out)
    # (k*k, N, C, H_out, W_out) -> (N, H_out, W_out, C, k*k)
    cols = jnp.stack(cols, axis=0)
    cols = jnp.transpose(cols, (1, 3, 4, 2, 0))
    # flatten K index as c*(k*k) + (i*k + j) -- matches PyTorch weight layout
    patches = cols.reshape(n * h_out * w_out, c * k * k)
    return patches, h_out, w_out


# ---------------------------------------------------------------------------
# Wrapper
# ---------------------------------------------------------------------------
def ada_module_forward(x, scales, weight, bias, *, stride=1, padding=0,
                       dilation=1, tile_m=1024, tile_n=512, tile_k=512,
                       fuse_k_max=1024):
    """x: (N, C_in, H, W); scales: (N, 1, H_out, W_out);
    weight: (C_out, C_in, k, k); bias: (C_out,)."""
    n, c_in, _, _ = x.shape
    c_out, _, k, _ = weight.shape
    out_dtype = x.dtype

    # bf16 cast *before* im2col: the k^2-replicated patches are written once,
    # in half width.
    patches, h_out, w_out = _im2col(x.astype(jnp.bfloat16), k, stride,
                                    padding, dilation)
    m = n * h_out * w_out
    kk = c_in * k * k

    # ---- K: 256-aligned; collapse the K grid axis whenever it fits. ----
    kk_pad = _round_up(kk, 256)
    if kk_pad <= max(fuse_k_max, 256):
        tk = kk_pad                       # one full-K pass per output tile
    else:
        tk = tile_k                       # 512 (multiple of 256)
        kk_pad = _round_up(kk, tk)
    split_k = (kk_pad // tk) > 1

    # ---- N (C_out): one lane-dense tile covering all of C_out if it fits,
    # so the (dominant) patches stream is fetched from HBM exactly once. ----
    cn_128 = _round_up(c_out, 128)
    if cn_128 <= tile_n:
        tn = cn_128
        cn_pad = cn_128
    else:
        tn = tile_n                       # 512 (multiple of 256)
        cn_pad = _round_up(c_out, tn)

    # ---- M: large tile, but keep >= 2 parallel tiles for v7x's 2 TCs. ----
    tm = min(tile_m, _round_up(m, 8))
    if (_cdiv(m, tm) * (cn_pad // tn)) < 2 and m > 8:
        tm = _round_up(_cdiv(m, 2), 8)
    m_pad = _round_up(m, tm)

    # ---- padded / bf16 operands ----
    patches_p = jnp.pad(patches, ((0, m_pad - m), (0, kk_pad - kk)))  # bf16
    w_mat = jnp.pad(weight.reshape(c_out, kk).T,
                    ((0, kk_pad - kk), (0, cn_pad - c_out))
                    ).astype(jnp.bfloat16)                            # (K_pad, Cout_pad)
    b_mat = jnp.pad(bias, (0, cn_pad - c_out)
                    ).reshape(1, cn_pad).astype(jnp.float32)          # (1, Cout_pad)
    s_mat = jnp.pad(jnp.transpose(scales, (0, 2, 3, 1)).reshape(m, 1),
                    ((0, m_pad - m), (0, 0))).astype(jnp.float32)     # (M_pad, 1)

    n_m_tiles = m_pad // tm
    n_n_tiles = cn_pad // tn

    if split_k:
        grid = (n_m_tiles, n_n_tiles, kk_pad // tk)
        in_specs = [
            pl.BlockSpec((tm, tk), lambda i, j, kq: (i, kq)),   # patches
            pl.BlockSpec((tk, tn), lambda i, j, kq: (kq, j)),   # weight
            pl.BlockSpec((1, tn), lambda i, j, kq: (0, j)),     # bias
            pl.BlockSpec((tm, 1), lambda i, j, kq: (i, 0)),     # scales
        ]
        out_spec = pl.BlockSpec((tm, tn), lambda i, j, kq: (i, j))
        dim_sem = ("parallel", "parallel", "arbitrary")
        # f32 output: accumulate directly into the resident output block.
        if jnp.dtype(out_dtype) == jnp.dtype(jnp.float32):
            scratch = []
        else:
            scratch = [pltpu.VMEM((tm, tn), jnp.float32)]
        kernel = _ada_conv_kernel_split_k
    else:
        grid = (n_m_tiles, n_n_tiles)
        in_specs = [
            pl.BlockSpec((tm, tk), lambda i, j: (i, 0)),        # patches
            pl.BlockSpec((tk, tn), lambda i, j: (0, j)),        # weight
            pl.BlockSpec((1, tn), lambda i, j: (0, j)),         # bias
            pl.BlockSpec((tm, 1), lambda i, j: (i, 0)),         # scales
        ]
        out_spec = pl.BlockSpec((tm, tn), lambda i, j: (i, j))
        dim_sem = ("parallel", "parallel")
        scratch = []
        kernel = _ada_conv_kernel_fused_k

    out_bytes = m_pad * cn_pad * jnp.dtype(out_dtype).itemsize
    cost = pl.CostEstimate(
        flops=2 * m_pad * kk_pad * cn_pad,
        transcendentals=0,
        bytes_accessed=(patches_p.size * 2 * n_n_tiles      # re-read per N tile
                        + w_mat.size * 2 * n_m_tiles        # re-read per M tile
                        + b_mat.size * 4 * n_m_tiles
                        + s_mat.size * 4 * n_n_tiles
                        + out_bytes))

    out_flat = pl.pallas_call(
        kernel,
        out_shape=jax.ShapeDtypeStruct((m_pad, cn_pad), out_dtype),
        grid_spec=pltpu.PrefetchScalarGridSpec(
            num_scalar_prefetch=0,
            grid=grid,
            in_specs=in_specs,
            out_specs=out_spec,
            scratch_shapes=scratch,
        ),
        compiler_params=pltpu.CompilerParams(
            dimension_semantics=dim_sem,
            vmem_limit_bytes=48 * 1024 * 1024),
        cost_estimate=cost,
    )(patches_p, w_mat, b_mat, s_mat)

    # (M_pad, Cout_pad) -> crop -> (N, H_out, W_out, C_out) -> NCHW
    out = out_flat[:m, :c_out].reshape(n, h_out, w_out, c_out)
    return jnp.transpose(out, (0, 3, 1, 2))


# ---------------------------------------------------------------------------
# Demo / self-check
# ---------------------------------------------------------------------------
def _run_case(key, n, c_in, c_out, h, w, k, stride, pad, dil):
    k_x, k_s, k_w, k_b = jax.random.split(key, 4)
    h_out = (h + 2 * pad - dil * (k - 1) - 1) // stride + 1
    w_out = (w + 2 * pad - dil * (k - 1) - 1) // stride + 1

    x = jax.random.normal(k_x, (n, c_in, h, w), dtype=jnp.float32)
    scales = jax.random.uniform(k_s, (n, 1, h_out, w_out), dtype=jnp.float32)

    fan_in = c_in * k * k
    bound = 1.0 / (fan_in ** 0.5)
    weight = jax.random.uniform(k_w, (c_out, c_in, k, k), dtype=jnp.float32,
                                minval=-bound, maxval=bound)
    bias = jax.random.uniform(k_b, (c_out,), dtype=jnp.float32,
                              minval=-bound, maxval=bound)

    out = ada_module_forward(x, scales, weight, bias,
                             stride=stride, padding=pad, dilation=dil)
    out = jax.block_until_ready(out)

    # Plain-JAX f32 reference (kernel uses bf16 MXU operands -> looser tol).
    ref = jax.lax.conv_general_dilated(
        x, weight, window_strides=(stride, stride),
        padding=((pad, pad), (pad, pad)),
        rhs_dilation=(dil, dil),
        dimension_numbers=("NCHW", "OIHW", "NCHW"))
    ref = (ref + bias.reshape(1, c_out, 1, 1)) * scales

    assert out.shape == (n, c_out, h_out, w_out)
    assert jnp.allclose(out, ref, atol=2e-2, rtol=2e-2), \
        float(jnp.max(jnp.abs(out - ref)))


if __name__ == "__main__":
    key = jax.random.PRNGKey(0)
    k1, k2 = jax.random.split(key)

    # Case 1: small shapes — K = 16*9 = 144 -> padded to 256, fused-K path
    # (single full-K MXU pass), 2 parallel M tiles.
    _run_case(k1, n=2, c_in=16, c_out=8, h=16, w=16, k=3, stride=1, pad=1, dil=1)

    # Case 2: K = 128*9 = 1152 > 1024 -> split-K path (3 K-tiles) with the
    # f32 output block doubling as the accumulator (no scratch).
    _run_case(k2, n=1, c_in=128, c_out=8, h=8, w=8, k=3, stride=1, pad=1, dil=1)

    print("KERNEL_OK")
</pallas_src>

<mosaic_0001>
module attributes {stable_mosaic.version = 11 : i64} {
  func.func @_ada_conv_kernel_fused_k(%arg0: i32, %arg1: i32, %arg2: memref<256x256xbf16, #tpu.memory_space<vmem>>, %arg3: memref<256x128xbf16, #tpu.memory_space<vmem>>, %arg4: memref<1x128xf32, #tpu.memory_space<vmem>>, %arg5: memref<256x1xf32, #tpu.memory_space<vmem>>, %arg6: memref<256x128xf32, #tpu.memory_space<vmem>>) attributes {dimension_semantics = [#tpu.dimension_semantics<parallel>, #tpu.dimension_semantics<parallel>], iteration_bounds = array<i64: 2, 1>, scalar_prefetch = 0 : i64, scratch_operands = 0 : i64, tpu.core_type = #tpu.core_type<tc>, window_params = [{transform_indices = @transform_0, window_bounds = array<i64: 256, 256>}, {transform_indices = @transform_1, window_bounds = array<i64: 256, 128>}, {transform_indices = @transform_2, window_bounds = array<i64: 1, 128>}, {transform_indices = @transform_3, window_bounds = array<i64: 256, 1>}, {transform_indices = @transform_4, window_bounds = array<i64: 256, 128>}]} {
    %c0 = arith.constant 0 : index
    %c0_0 = arith.constant 0 : index
    %0 = vector.load %arg2[%c0, %c0_0] : memref<256x256xbf16, #tpu.memory_space<vmem>>, vector<256x256xbf16>
    %c0_1 = arith.constant 0 : index
    %c0_2 = arith.constant 0 : index
    %1 = vector.load %arg3[%c0_1, %c0_2] : memref<256x128xbf16, #tpu.memory_space<vmem>>, vector<256x128xbf16>
    %cst = arith.constant dense<0.000000e+00> : vector<256x128xf32>
    %2 = tpu.matmul %0, %1, %cst {dimension_numbers = #tpu.dot_dimension_numbers<[1], [0], [0], [1], [0, 0, 1, 1], [], []>} : vector<256x256xbf16>, vector<256x128xbf16>, vector<256x128xf32> -> vector<256x128xf32>
    %c0_3 = arith.constant 0 : index
    %c0_4 = arith.constant 0 : index
    %3 = vector.load %arg4[%c0_3, %c0_4] : memref<1x128xf32, #tpu.memory_space<vmem>>, vector<1x128xf32>
    %4 = vector.broadcast %3 : vector<1x128xf32> to vector<256x128xf32>
    %5 = arith.addf %2, %4 : vector<256x128xf32>
    %c0_5 = arith.constant 0 : index
    %c0_6 = arith.constant 0 : index
    %6 = vector.load %arg5[%c0_5, %c0_6] : memref<256x1xf32, #tpu.memory_space<vmem>>, vector<256x1xf32>
    %7 = vector.broadcast %6 : vector<256x1xf32> to vector<256x128xf32>
    %8 = arith.mulf %5, %7 : vector<256x128xf32>
    %c0_7 = arith.constant 0 : index
    %c0_8 = arith.constant 0 : index
    %9 = vector.load %arg6[%c0_7, %c0_8] : memref<256x128xf32, #tpu.memory_space<vmem>>, vector<256x128xf32>
    tpu.vector_store %arg6[%c0_7, %c0_8], %8 {strides = array<i32>} : memref<256x128xf32, #tpu.memory_space<vmem>>, vector<256x128xf32>,
    return
  }
  func.func @transform_0(%arg0: i32, %arg1: i32) -> (i32, i32) {
    %c0_i32 = arith.constant 0 : i32
    %c0_i32_0 = arith.constant 0 : i32
    return %arg0, %c0_i32 : i32, i32
  }
  func.func @transform_1(%arg0: i32, %arg1: i32) -> (i32, i32) {
    %c0_i32 = arith.constant 0 : i32
    %c0_i32_0 = arith.constant 0 : i32
    return %c0_i32, %arg1 : i32, i32
  }
  func.func @transform_2(%arg0: i32, %arg1: i32) -> (i32, i32) {
    %c0_i32 = arith.constant 0 : i32
    %c0_i32_0 = arith.constant 0 : i32
    return %c0_i32, %arg1 : i32, i32
  }
  func.func @transform_3(%arg0: i32, %arg1: i32) -> (i32, i32) {
    %c0_i32 = arith.constant 0 : i32
    %c0_i32_0 = arith.constant 0 : i32
    return %arg0, %c0_i32 : i32, i32
  }
  func.func @transform_4(%arg0: i32, %arg1: i32) -> (i32, i32) {
    %c0_i32 = arith.constant 0 : i32
    return %arg0, %arg1 : i32, i32
  }
}

</mosaic_0001>

<llo_original>
// kernel: tpu_custom_call.1
$region0: #{tpu_custom_call.1}
  #allocation0 [shape = 'u32[]', space=smem, size = 0x4, offset = 0x4, fixed_abs, tag = 'smem constant byte address 0x4 - core index']
  #allocation1 [shape = 'u32[72,128]{1,0:T(1,128)}', space=vmem, size = 0x9000, scoped, tag = 'internal scratch']
  %s0 = inlined_call_operand.vmem [shape: bf16[512,256], index: 0, kind: input, shape index: {}]
  %s1 = inlined_call_operand.hbm [shape: bf16[256,128], index: 1, kind: input, shape index: {}]
  %s2 = inlined_call_operand.vmem [shape: f32[1,128], index: 2, kind: input, shape index: {}]
  %s3 = inlined_call_operand.vmem [shape: f32[512,1], index: 3, kind: input, shape index: {}]
  %s4 = inlined_call_operand.hbm [shape: f32[512,128], index: 4, kind: output, shape index: {}]
  %s5 = sld [smem:[#allocation0]]
  $region53: #{tpu_custom_call.1} parent=0
    _
  %s7 = ssub.s32 1, %s5
  %s8 = scalar_select 0, %s7, %s5
  $region1: #{tpu_custom_call.1} parent=0
    #allocation2 [shape = 'u8[65536]{0}', space=vmem, size = 0x10000, scoped, tag = 'input window, operand 1, single buffered']
    #allocation3 [shape = 's32[2]{0}', space=sflag, size = 0x8, scoped, tag = 'scoped memory for tpu_custom_call.1']
    #allocation4 [shape = 's32[2]{0}', space=sflag, size = 0x8, scoped, tag = 'scoped memory for tpu_custom_call.1']
    #allocation5 [shape = 'u8[262144]{0}', space=vmem, size = 0x40000, scoped, tag = 'output window, operand 0']
    %9 = vsyncpa [#allocation3], 0
    %10 = vsyncpa [#allocation4], 0
    %s11 = scalar_lea.sflag [#allocation4], 1
    %12 = vsyncpa %s11, 0
    loop: start=0, step=1, limit=4
    $region2: #{tpu_custom_call.1} parent=1 // loop_pre_header
      _
    $region3: #{tpu_custom_call.1} parent=1 // loop_header
      %s14 = sphi 0, %s18
      %p15 = scmp.ge.s32.totalorder %s14, 4
      %s21 = sphi 0, %s33
      %s22 = sphi 0, %s29
      %s23 = sphi 0, %s21
      %s24 = sphi 0, %s22
      %s25 = sphi 0, %s23
      %s26 = sphi 0, %s24
      %s36 = sphi 0, %s38
      %s39 = sphi 0, %s36
      %s40 = sphi 0, %s39
      %s56 = sphi 0, %s40
      %s62 = sphi 0, %s64
      %s65 = sphi 0, %s62
      %s66 = sphi 0, %s65
      %s82 = sphi 0, %s66
      %s88 = sphi 0, %s90
      %s91 = sphi 0, %s88
      %s92 = sphi 0, %s91
      %s108 = sphi 0, %s92
      %s114 = sphi 0, %s116
      %s117 = sphi 0, %s114
      %s118 = sphi 0, %s117
      %s134 = sphi 0, %s118
      %s142 = sphi 0, %s144
      %s145 = sphi 0, %s142
      %s146 = sphi 0, %s145
      %s162 = sphi 0, %s146
    $region4: #{tpu_custom_call.1} parent=1 // loop_header_branch
      %17 = sbr.rel (%p15) target = $region8
    $region5: #{tpu_custom_call.1} parent=1 // loop_body
      %s19 = ssub.s32 %s14, 1
      %s20 = ssub.s32 %s14, 2
      %s27 = sadd.s32 1, %s22
      %p28 = scmp.ge.s32.totalorder %s27, 1
      %s29 = scalar_select %p28, 0, %s27
      %s30 = sadd.s32 1, %s21
      %s31 = scalar_select %p28, %s30, %s21
      %p32 = scmp.ge.s32.totalorder %s31, 2
      %s33 = scalar_select %p32, 0, %s31
      %s34 = ssub.s32 %s21, %s33
      %p35 = scmp.eq.s32.totalorder %s34, 0
      %s37 = sadd.s32 %s36, 1
      %s38 = scalar_select %p35, %s36, %s37
      %p41 = pneg %p35
      %p42 = scmp.eq.s32.totalorder %s14, 1
      %p43 = por %p41, %p42
      %p44 = scmp.ne.s32.totalorder %s36, %s39
      %p45 = scmp.eq.s32.totalorder %s14, 0
      %p46 = por %p44, %p45
      %p47 = scmp.ne.s32.totalorder %s36, %s39
      %p48 = scmp.eq.s32.totalorder %s19, 1
      %p49 = por %p47, %p48
      %p50 = scmp.ne.s32.totalorder %s39, %s40
      %p51 = scmp.eq.s32.totalorder %s19, 0
      %p52 = por %p50, %p51
      %p53 = scmp.ne.s32.totalorder %s39, %s40
      %p54 = scmp.eq.s32.totalorder %s20, 1
      %p55 = por %p53, %p54
      %p57 = scmp.ne.s32.totalorder %s40, %s56
      %p58 = scmp.eq.s32.totalorder %s20, 0
      %p59 = por %p57, %p58
      %s60 = ssub.s32 %s22, %s29
      %p61 = scmp.eq.s32.totalorder %s60, 0
      %s63 = sadd.s32 %s62, 1
      %s64 = scalar_select %p61, %s62, %s63
      %p67 = pneg %p61
      %p68 = scmp.eq.s32.totalorder %s14, 1
      %p69 = por %p67, %p68
      %p70 = scmp.ne.s32.totalorder %s62, %s65
      %p71 = scmp.eq.s32.totalorder %s14, 0
      %p72 = por %p70, %p71
      %p73 = scmp.ne.s32.totalorder %s62, %s65
      %p74 = scmp.eq.s32.totalorder %s19, 1
      %p75 = por %p73, %p74
      %p76 = scmp.ne.s32.totalorder %s65, %s66
      %p77 = scmp.eq.s32.totalorder %s19, 0
      %p78 = por %p76, %p77
      %p79 = scmp.ne.s32.totalorder %s65, %s66
      %p80 = scmp.eq.s32.totalorder %s20, 1
      %p81 = por %p79, %p80
      %p83 = scmp.ne.s32.totalorder %s66, %s82
      %p84 = scmp.eq.s32.totalorder %s20, 0
      %p85 = por %p83, %p84
      %s86 = ssub.s32 %s22, %s29
      %p87 = scmp.eq.s32.totalorder %s86, 0
      %s89 = sadd.s32 %s88, 1
      %s90 = scalar_select %p87, %s88, %s89
      %p93 = pneg %p87
      %p94 = scmp.eq.s32.totalorder %s14, 1
      %p95 = por %p93, %p94
      %p96 = scmp.ne.s32.totalorder %s88, %s91
      %p97 = scmp.eq.s32.totalorder %s14, 0
      %p98 = por %p96, %p97
      %p99 = scmp.ne.s32.totalorder %s88, %s91
      %p100 = scmp.eq.s32.totalorder %s19, 1
      %p101 = por %p99, %p100
      %p102 = scmp.ne.s32.totalorder %s91, %s92
      %p103 = scmp.eq.s32.totalorder %s19, 0
      %p104 = por %p102, %p103
      %p105 = scmp.ne.s32.totalorder %s91, %s92
      %p106 = scmp.eq.s32.totalorder %s20, 1
      %p107 = por %p105, %p106
      %p109 = scmp.ne.s32.totalorder %s92, %s108
      %p110 = scmp.eq.s32.totalorder %s20, 0
      %p111 = por %p109, %p110
      %s112 = ssub.s32 %s21, %s33
      %p113 = scmp.eq.s32.totalorder %s112, 0
      %s115 = sadd.s32 %s114, 1
      %s116 = scalar_select %p113, %s114, %s115
      %p119 = pneg %p113
      %p120 = scmp.eq.s32.totalorder %s14, 1
      %p121 = por %p119, %p120
      %p122 = scmp.ne.s32.totalorder %s114, %s117
      %p123 = scmp.eq.s32.totalorder %s14, 0
      %p124 = por %p122, %p123
      %p125 = scmp.ne.s32.totalorder %s114, %s117
      %p126 = scmp.eq.s32.totalorder %s19, 1
      %p127 = por %p125, %p126
      %p128 = scmp.ne.s32.totalorder %s117, %s118
      %p129 = scmp.eq.s32.totalorder %s19, 0
      %p130 = por %p128, %p129
      %p131 = scmp.ne.s32.totalorder %s117, %s118
      %p132 = scmp.eq.s32.totalorder %s20, 1
      %p133 = por %p131, %p132
      %p135 = scmp.ne.s32.totalorder %s118, %s134
      %p136 = scmp.eq.s32.totalorder %s20, 0
      %p137 = por %p135, %p136
      %s138 = ssub.s32 %s21, %s33
      %s139 = ssub.s32 %s22, %s29
      %s140 = sor.u32 %s138, %s139
      %p141 = scmp.eq.s32.totalorder %s140, 0
      %s143 = sadd.s32 %s142, 1
      %s144 = scalar_select %p141, %s142, %s143
      %p147 = pneg %p141
      %p148 = scmp.eq.s32.totalorder %s14, 1
      %p149 = por %p147, %p148
      %p150 = scmp.ne.s32.totalorder %s142, %s145
      %p151 = scmp.eq.s32.totalorder %s14, 0
      %p152 = por %p150, %p151
      %p153 = scmp.ne.s32.totalorder %s142, %s145
      %p154 = scmp.eq.s32.totalorder %s19, 1
      %p155 = por %p153, %p154
      %p156 = scmp.ne.s32.totalorder %s145, %s146
      %p157 = scmp.eq.s32.totalorder %s19, 0
      %p158 = por %p156, %p157
      %p159 = scmp.ne.s32.totalorder %s145, %s146
      %p160 = scmp.eq.s32.totalorder %s20, 1
      %p161 = por %p159, %p160
      %p163 = scmp.ne.s32.totalorder %s146, %s162
      %p164 = scmp.eq.s32.totalorder %s20, 0
      %p165 = por %p163, %p164
      %p166 = scmp.le.s32.totalorder 1, %s14
      %p167 = scmp.lt.s32.totalorder %s14, 3
      %p168 = pnand %p166, %p167
      %p169 = pneg %p168
      // Predicated region
      $region9: #{tpu_custom_call.1} parent=5 // pred_check
        _
      $region10: #{tpu_custom_call.1} parent=5 // pred_check_branch
        %171 = sbr.rel (%p168) target = $region12
      $region11: #{tpu_custom_call.1} parent=5 // pred_region
        %s172 = ssub.s32 %s14, 1
        // Predicated region
        $region13: #{tpu_custom_call.1} parent=11 // pred_check
          %p173 = pneg %p78
        $region14: #{tpu_custom_call.1} parent=11 // pred_check_branch
          %175 = sbr.rel (%p173) target = $region16
        $region15: #{tpu_custom_call.1} parent=11 // pred_region
          %177 = vsyncadd [#allocation3], 0
          %s178 = smul.addr %s24, 4
          %s179 = scalar_lea.hbm %s1, %s178
          %s180 = sshll.u32 %s179, 4
          %s181 = int_to_ptr.hbm [resolvable:$true] %s180
          %s182 = sshll.u32 [#allocation2], 4
          %s183 = int_to_ptr.vmem [resolvable:$true] %s182
          %188 = dma.hbm_to_vmem [thread:$0]  %s181, 2048, %s183, [#allocation3], 64, 64, 4
        $region16: #{tpu_custom_call.1} parent=11 // pred_fallthru
          _
        // Predicated region
        $region17: #{tpu_custom_call.1} parent=11 // pred_check
          %p189 = pneg %p104
        $region18: #{tpu_custom_call.1} parent=11 // pred_check_branch
          %191 = sbr.rel (%p189) target = $region20
        $region19: #{tpu_custom_call.1} parent=11 // pred_region
          %p192 = scmp.lt.s32.totalorder %s24, 0
          %s193 = scalar_select %p192, %s24, 0
          %s194 = scalar_lea.vmem %s2, %s193
        $region20: #{tpu_custom_call.1} parent=11 // pred_fallthru
          _
      $region12: #{tpu_custom_call.1} parent=5 // pred_fallthru
        _
      %p195 = scmp.lt.s32.totalorder %s14, 2
      // Predicated region
      $region21: #{tpu_custom_call.1} parent=5 // pred_check
        %p196 = pneg %p195
      $region22: #{tpu_custom_call.1} parent=5 // pred_check_branch
        %198 = sbr.rel (%p196) target = $region24
      $region23: #{tpu_custom_call.1} parent=5 // pred_region
        // Predicated region
        $region25: #{tpu_custom_call.1} parent=23 // pred_check
          %p199 = pneg %p46
        $region26: #{tpu_custom_call.1} parent=23 // pred_check_branch
          %201 = sbr.rel (%p199) target = $region28
        $region27: #{tpu_custom_call.1} parent=23 // pred_region
          %s202 = smul.u32 32, %s21
          %p203 = scmp.lt.s32.totalorder %s202, 63
          %s204 = scalar_select %p203, %s202, 63
          %s205 = smul.addr %s204, 2
          %s206 = smul.addr %s205, 4
          %s207 = scalar_lea.vmem %s0, %s206
          %s208 = smul.u32 32, %s21
        $region28: #{tpu_custom_call.1} parent=23 // pred_fallthru
          _
        // Predicated region
        $region29: #{tpu_custom_call.1} parent=23 // pred_check
          %p209 = pneg %p124
        $region30: #{tpu_custom_call.1} parent=23 // pred_check_branch
          %211 = sbr.rel (%p209) target = $region32
        $region31: #{tpu_custom_call.1} parent=23 // pred_region
          %s212 = smul.u32 32, %s21
          %p213 = scmp.lt.s32.totalorder %s212, 63
          %s214 = scalar_select %p213, %s212, 63
          %s215 = smul.addr %s214, 8
          %s216 = scalar_lea.vmem %s3, %s215
          %s217 = smul.u32 32, %s21
        $region32: #{tpu_custom_call.1} parent=23 // pred_fallthru
          _
      $region24: #{tpu_custom_call.1} parent=5 // pred_fallthru
        _
      %p218 = scmp.le.s32.totalorder 1, %s14
      %p219 = scmp.lt.s32.totalorder %s14, 3
      %p220 = pnand %p218, %p219
      %p221 = pneg %p220
      // Predicated region
      $region33: #{tpu_custom_call.1} parent=5 // pred_check
        _
      $region34: #{tpu_custom_call.1} parent=5 // pred_check_branch
        %223 = sbr.rel (%p220) target = $region36
      $region35: #{tpu_custom_call.1} parent=5 // pred_region
        %s224 = ssub.s32 %s14, 1
        // Predicated region
        $region37: #{tpu_custom_call.1} parent=35 // pred_check
          %p225 = pneg %p78
        $region38: #{tpu_custom_call.1} parent=35 // pred_check_branch
          %227 = sbr.rel (%p225) target = $region40
        $region39: #{tpu_custom_call.1} parent=35 // pred_region
          %229 = dma.done [#allocation3], 2048
        $region40: #{tpu_custom_call.1} parent=35 // pred_fallthru
          _
        %s230 = smul.u32 32, %s23
        %p231 = scmp.lt.s32.totalorder %s230, 63
        %s232 = scalar_select %p231, %s230, 63
        %s233 = smul.addr %s232, 2
        %s234 = smul.addr %s233, 4
        %s235 = scalar_lea.vmem %s0, %s234
        %p236 = pneg %p52
        %p237 = pneg %p49
        %p238 = pneg %p78
        %p239 = pneg %p75
        %p240 = scmp.lt.s32.totalorder %s24, 0
        %s241 = scalar_select %p240, %s24, 0
        %s242 = scalar_lea.vmem %s2, %s241
        %p243 = pneg %p104
        %p244 = pneg %p101
        %s245 = smul.u32 32, %s23
        %p246 = scmp.lt.s32.totalorder %s245, 63
        %s247 = scalar_select %p246, %s245, 63
        %s248 = smul.addr %s247, 8
        %s249 = scalar_lea.vmem %s3, %s248
        %p250 = pneg %p130
        %p251 = pneg %p127
        %p252 = pneg %p158
        %p253 = pneg %p155
        %s254 = sand.u32 %s145, 1
        %s255 = scalar_lea.sflag [#allocation4], %s254
        %s256 = sand.u32 %s145, 1
        %s257 = smul.addr %s256, 256
        %s258 = scalar_lea.vmem [#allocation5], %s257
        %s259 = smul.u32 32, %s23
        %p260 = scmp.lt.s32.totalorder %s259, 63
        %s261 = scalar_select %p260, %s259, 63
        %s262 = smul.addr %s261, 2
        %s263 = smul.addr %s262, 4
        %s264 = scalar_lea.vmem %s0, %s263
        %s265 = smul.u32 32, %s23
        %p266 = scmp.lt.s32.totalorder %s24, 0
        %s267 = scalar_select %p266, %s24, 0
        %s268 = scalar_lea.vmem %s2, %s267
        %s269 = smul.u32 32, %s23
        %p270 = scmp.lt.s32.totalorder %s269, 63
        %s271 = scalar_select %p270, %s269, 63
        %s272 = smul.addr %s271, 8
        %s273 = scalar_lea.vmem %s3, %s272
        %s274 = smul.u32 32, %s23
        %s275 = smul.u32 32, %s23
        %v276 = vld [vmem:[%s264] sm:$0xff]
        %v277 = vld [vmem:[%s264 + $0x8] sm:$0xff]
        %v278 = vld [vmem:[%s264 + $0x10] sm:$0xff]
        %v279 = vld [vmem:[%s264 + $0x18] sm:$0xff]
        %v280 = vld [vmem:[%s264 + $0x20] sm:$0xff]
        %v281 = vld [vmem:[%s264 + $0x28] sm:$0xff]
        %v282 = vld [vmem:[%s264 + $0x30] sm:$0xff]
        %v283 = vld [vmem:[%s264 + $0x38] sm:$0xff]
        %v284 = vld [vmem:[%s264 + $0x40] sm:$0xff]
        %v285 = vld [vmem:[%s264 + $0x48] sm:$0xff]
        %v286 = vld [vmem:[%s264 + $0x50] sm:$0xff]
        %v287 = vld [vmem:[%s264 + $0x58] sm:$0xff]
        %v288 = vld [vmem:[%s264 + $0x60] sm:$0xff]
        %v289 = vld [vmem:[%s264 + $0x68] sm:$0xff]
        %v290 = vld [vmem:[%s264 + $0x70] sm:$0xff]
        %v291 = vld [vmem:[%s264 + $0x78] sm:$0xff]
        %v292 = vld [vmem:[%s264 + $0x80] sm:$0xff]
        %v293 = vld [vmem:[%s264 + $0x88] sm:$0xff]
        %v294 = vld [vmem:[%s264 + $0x90] sm:$0xff]
        %v295 = vld [vmem:[%s264 + $0x98] sm:$0xff]
        %v296 = vld [vmem:[%s264 + $0xa0] sm:$0xff]
        %v297 = vld [vmem:[%s264 + $0xa8] sm:$0xff]
        %v298 = vld [vmem:[%s264 + $0xb0] sm:$0xff]
        %v299 = vld [vmem:[%s264 + $0xb8] sm:$0xff]
        %v300 = vld [vmem:[%s264 + $0xc0] sm:$0xff]
        %v301 = vld [vmem:[%s264 + $0xc8] sm:$0xff]
        %v302 = vld [vmem:[%s264 + $0xd0] sm:$0xff]
        %v303 = vld [vmem:[%s264 + $0xd8] sm:$0xff]
        %v304 = vld [vmem:[%s264 + $0xe0] sm:$0xff]
        %v305 = vld [vmem:[%s264 + $0xe8] sm:$0xff]
        %v306 = vld [vmem:[%s264 + $0xf0] sm:$0xff]
        %v307 = vld [vmem:[%s264 + $0xf8] sm:$0xff]
        %v308 = vld [vmem:[#allocation2] sm:$0xf]
        %v309 = vld [vmem:[#allocation2 + $0x4] sm:$0xf]
        %v310 = vld [vmem:[#allocation2 + $0x8] sm:$0xf]
        %v311 = vld [vmem:[#allocation2 + $0xc] sm:$0xf]
        %v312 = vld [vmem:[#allocation2 + $0x10] sm:$0xf]
        %v313 = vld [vmem:[#allocation2 + $0x14] sm:$0xf]
        %v314 = vld [vmem:[#allocation2 + $0x18] sm:$0xf]
        %v315 = vld [vmem:[#allocation2 + $0x1c] sm:$0xf]
        %v316 = vld [vmem:[#allocation2 + $0x20] sm:$0xf]
        %v317 = vld [vmem:[#allocation2 + $0x24] sm:$0xf]
        %v318 = vld [vmem:[#allocation2 + $0x28] sm:$0xf]
        %v319 = vld [vmem:[#allocation2 + $0x2c] sm:$0xf]
        %v320 = vld [vmem:[#allocation2 + $0x30] sm:$0xf]
        %v321 = vld [vmem:[#allocation2 + $0x34] sm:$0xf]
        %v322 = vld [vmem:[#allocation2 + $0x38] sm:$0xf]
        %v323 = vld [vmem:[#allocation2 + $0x3c] sm:$0xf]
        %v324 = vld [vmem:[#allocation2 + $0x40] sm:$0xf]
        %v325 = vld [vmem:[#allocation2 + $0x44] sm:$0xf]
        %v326 = vld [vmem:[#allocation2 + $0x48] sm:$0xf]
        %v327 = vld [vmem:[#allocation2 + $0x4c] sm:$0xf]
        %v328 = vld [vmem:[#allocation2 + $0x50] sm:$0xf]
        %v329 = vld [vmem:[#allocation2 + $0x54] sm:$0xf]
        %v330 = vld [vmem:[#allocation2 + $0x58] sm:$0xf]
        %v331 = vld [vmem:[#allocation2 + $0x5c] sm:$0xf]
        %v332 = vld [vmem:[#allocation2 + $0x60] sm:$0xf]
        %v333 = vld [vmem:[#allocation2 + $0x64] sm:$0xf]
        %v334 = vld [vmem:[#allocation2 + $0x68] sm:$0xf]
        %v335 = vld [vmem:[#allocation2 + $0x6c] sm:$0xf]
        %v336 = vld [vmem:[#allocation2 + $0x70] sm:$0xf]
        %v337 = vld [vmem:[#allocation2 + $0x74] sm:$0xf]
        %v338 = vld [vmem:[#allocation2 + $0x78] sm:$0xf]
        %v339 = vld [vmem:[#allocation2 + $0x7c] sm:$0xf]
        %v340 = vld [vmem:[%s268] sm:$0x1]
        %v342 = vperm.slane %v340, 0
        %v376 = vunpack.c.l.b16 %v276
        %v377 = vunpack.c.h.b16 %v276
        %v378 = vunpack.c.l.b16 %v277
        %v379 = vunpack.c.h.b16 %v277
        %v380 = vunpack.c.l.b16 %v278
        %v381 = vunpack.c.h.b16 %v278
        %v382 = vunpack.c.l.b16 %v279
        %v383 = vunpack.c.h.b16 %v279
        %v384 = vunpack.c.l.b16 %v280
        %v385 = vunpack.c.h.b16 %v280
        %v386 = vunpack.c.l.b16 %v281
        %v387 = vunpack.c.h.b16 %v281
        %v388 = vunpack.c.l.b16 %v282
        %v389 = vunpack.c.h.b16 %v282
        %v390 = vunpack.c.l.b16 %v283
        %v391 = vunpack.c.h.b16 %v283
        %v392 = vunpack.c.l.b16 %v284
        %v393 = vunpack.c.h.b16 %v284
        %v394 = vunpack.c.l.b16 %v285
        %v395 = vunpack.c.h.b16 %v285
        %v396 = vunpack.c.l.b16 %v286
        %v397 = vunpack.c.h.b16 %v286
        %v398 = vunpack.c.l.b16 %v287
        %v399 = vunpack.c.h.b16 %v287
        %v400 = vunpack.c.l.b16 %v288
        %v401 = vunpack.c.h.b16 %v288
        %v402 = vunpack.c.l.b16 %v289
        %v403 = vunpack.c.h.b16 %v289
        %v404 = vunpack.c.l.b16 %v290
        %v405 = vunpack.c.h.b16 %v290
        %v406 = vunpack.c.l.b16 %v291
        %v407 = vunpack.c.h.b16 %v291
        %v408 = vunpack.c.l.b16 %v292
        %v409 = vunpack.c.h.b16 %v292
        %v410 = vunpack.c.l.b16 %v293
        %v411 = vunpack.c.h.b16 %v293
        %v412 = vunpack.c.l.b16 %v294
        %v413 = vunpack.c.h.b16 %v294
        %v414 = vunpack.c.l.b16 %v295
        %v415 = vunpack.c.h.b16 %v295
        %v416 = vunpack.c.l.b16 %v296
        %v417 = vunpack.c.h.b16 %v296
        %v418 = vunpack.c.l.b16 %v297
        %v419 = vunpack.c.h.b16 %v297
        %v420 = vunpack.c.l.b16 %v298
        %v421 = vunpack.c.h.b16 %v298
        %v422 = vunpack.c.l.b16 %v299
        %v423 = vunpack.c.h.b16 %v299
        %v424 = vunpack.c.l.b16 %v300
        %v425 = vunpack.c.h.b16 %v300
        %v426 = vunpack.c.l.b16 %v301
        %v427 = vunpack.c.h.b16 %v301
        %v428 = vunpack.c.l.b16 %v302
        %v429 = vunpack.c.h.b16 %v302
        %v430 = vunpack.c.l.b16 %v303
        %v431 = vunpack.c.h.b16 %v303
        %v432 = vunpack.c.l.b16 %v304
        %v433 = vunpack.c.h.b16 %v304
        %v434 = vunpack.c.l.b16 %v305
        %v435 = vunpack.c.h.b16 %v305
        %v436 = vunpack.c.l.b16 %v306
        %v437 = vunpack.c.h.b16 %v306
        %v438 = vunpack.c.l.b16 %v307
        %v439 = vunpack.c.h.b16 %v307
        %v440 = vpack.c.b16 %v378, %v376
        %v441 = vpack.c.b16 %v379, %v377
        %v442 = vpack.c.b16 %v382, %v380
        %v443 = vpack.c.b16 %v383, %v381
        %v444 = vpack.c.b16 %v386, %v384
        %v445 = vpack.c.b16 %v387, %v385
        %v446 = vpack.c.b16 %v390, %v388
        %v447 = vpack.c.b16 %v391, %v389
        %v448 = vpack.c.b16 %v394, %v392
        %v449 = vpack.c.b16 %v395, %v393
        %v450 = vpack.c.b16 %v398, %v396
        %v451 = vpack.c.b16 %v399, %v397
        %v452 = vpack.c.b16 %v402, %v400
        %v453 = vpack.c.b16 %v403, %v401
        %v454 = vpack.c.b16 %v406, %v404
        %v455 = vpack.c.b16 %v407, %v405
        %v456 = vpack.c.b16 %v410, %v408
        %v457 = vpack.c.b16 %v411, %v409
        %v458 = vpack.c.b16 %v414, %v412
        %v459 = vpack.c.b16 %v415, %v413
        %v460 = vpack.c.b16 %v418, %v416
        %v461 = vpack.c.b16 %v419, %v417
        %v462 = vpack.c.b16 %v422, %v420
        %v463 = vpack.c.b16 %v423, %v421
        %v464 = vpack.c.b16 %v426, %v424
        %v465 = vpack.c.b16 %v427, %v425
        %v466 = vpack.c.b16 %v430, %v428
        %v467 = vpack.c.b16 %v431, %v429
        %v468 = vpack.c.b16 %v434, %v432
        %v469 = vpack.c.b16 %v435, %v433
        %v470 = vpack.c.b16 %v438, %v436
        %v471 = vpack.c.b16 %v439, %v437
        %v536 = vunpack.c.l.b16 %v308
        %v537 = vunpack.c.l.b16 %v309
        %v538 = vunpack.c.l.b16 %v310
        %v539 = vunpack.c.l.b16 %v311
        %v540 = vunpack.c.l.b16 %v312
        %v541 = vunpack.c.l.b16 %v313
        %v542 = vunpack.c.l.b16 %v314
        %v543 = vunpack.c.l.b16 %v315
        %v544 = vunpack.c.l.b16 %v316
        %v545 = vunpack.c.l.b16 %v317
        %v546 = vunpack.c.l.b16 %v318
        %v547 = vunpack.c.l.b16 %v319
        %v548 = vunpack.c.l.b16 %v320
        %v549 = vunpack.c.l.b16 %v321
        %v550 = vunpack.c.l.b16 %v322
        %v551 = vunpack.c.l.b16 %v323
        %v552 = vunpack.c.l.b16 %v324
        %v553 = vunpack.c.l.b16 %v325
        %v554 = vunpack.c.l.b16 %v326
        %v555 = vunpack.c.l.b16 %v327
        %v556 = vunpack.c.l.b16 %v328
        %v557 = vunpack.c.l.b16 %v329
        %v558 = vunpack.c.l.b16 %v330
        %v559 = vunpack.c.l.b16 %v331
        %v560 = vunpack.c.l.b16 %v332
        %v561 = vunpack.c.l.b16 %v333
        %v562 = vunpack.c.l.b16 %v334
        %v563 = vunpack.c.l.b16 %v335
        %v564 = vunpack.c.l.b16 %v336
        %v565 = vunpack.c.l.b16 %v337
        %v566 = vunpack.c.l.b16 %v338
        %v567 = vunpack.c.l.b16 %v339
        %v568 = vpack.c.b16 %v537, %v536
        %v569 = vpack.c.b16 %v539, %v538
        %v570 = vpack.c.b16 %v541, %v540
        %v571 = vpack.c.b16 %v543, %v542
        %v572 = vpack.c.b16 %v545, %v544
        %v573 = vpack.c.b16 %v547, %v546
        %v574 = vpack.c.b16 %v549, %v548
        %v575 = vpack.c.b16 %v551, %v550
        %v576 = vpack.c.b16 %v553, %v552
        %v577 = vpack.c.b16 %v555, %v554
        %v578 = vpack.c.b16 %v557, %v556
        %v579 = vpack.c.b16 %v559, %v558
        %v580 = vpack.c.b16 %v561, %v560
        %v581 = vpack.c.b16 %v563, %v562
        %v582 = vpack.c.b16 %v565, %v564
        %v583 = vpack.c.b16 %v567, %v566
        %600 = vmatpush.bf16.msra.mxu0 %v575
        %601 = vmatpush.bf16.msra.mxu0 %v574
        %602 = vmatpush.bf16.msra.mxu0 %v573
        %603 = vmatpush.bf16.msra.mxu0 %v572
        %604 = vmatpush.bf16.msra.mxu0 %v571
        %605 = vmatpush.bf16.msra.mxu0 %v570
        %606 = vmatpush.bf16.msra.mxu0 %v569
        %607 = vmatpush.bf16.msra.mxu0 %v568
        %608 = vmatmul.bf16.gmra.mxu0 %v440
        %v609 = vpop.f32.mrf.mxu0
        %v610 = vadd.f32 %v342, %v609
        %v611 = vpop.f32.mrf.mxu0
        %v612 = vadd.f32 %v342, %v611
        %613 = vmatmul.bf16.gmra.mxu0 %v442
        %v614 = vpop.f32.mrf.mxu0
        %v615 = vadd.f32 %v342, %v614
        %v616 = vpop.f32.mrf.mxu0
        %v617 = vadd.f32 %v342, %v616
        %618 = vmatmul.bf16.gmra.mxu0 %v444
        %v619 = vpop.f32.mrf.mxu0
        %v620 = vadd.f32 %v342, %v619
        %v621 = vpop.f32.mrf.mxu0
        %v622 = vadd.f32 %v342, %v621
        %623 = vmatmul.bf16.gmra.mxu0 %v446
        %v624 = vpop.f32.mrf.mxu0
        %v625 = vadd.f32 %v342, %v624
        %v626 = vpop.f32.mrf.mxu0
        %v627 = vadd.f32 %v342, %v626
        %628 = vmatmul.bf16.gmra.mxu0 %v448
        %v629 = vpop.f32.mrf.mxu0
        %v630 = vadd.f32 %v342, %v629
        %v631 = vpop.f32.mrf.mxu0
        %v632 = vadd.f32 %v342, %v631
        %633 = vmatmul.bf16.gmra.mxu0 %v450
        %v634 = vpop.f32.mrf.mxu0
        %v635 = vadd.f32 %v342, %v634
        %v636 = vpop.f32.mrf.mxu0
        %v637 = vadd.f32 %v342, %v636
        %638 = vmatmul.bf16.gmra.mxu0 %v452
        %v639 = vpop.f32.mrf.mxu0
        %v640 = vadd.f32 %v342, %v639
        %v641 = vpop.f32.mrf.mxu0
        %v642 = vadd.f32 %v342, %v641
        %643 = vmatmul.bf16.gmra.mxu0 %v454
        %v644 = vpop.f32.mrf.mxu0
        %v645 = vadd.f32 %v342, %v644
        %v646 = vpop.f32.mrf.mxu0
        %v647 = vadd.f32 %v342, %v646
        %648 = vmatmul.bf16.gmra.mxu0 %v456
        %v649 = vpop.f32.mrf.mxu0
        %v650 = vadd.f32 %v342, %v649
        %v651 = vpop.f32.mrf.mxu0
        %v652 = vadd.f32 %v342, %v651
        %653 = vmatmul.bf16.gmra.mxu0 %v458
        %v654 = vpop.f32.mrf.mxu0
        %v655 = vadd.f32 %v342, %v654
        %v656 = vpop.f32.mrf.mxu0
        %v657 = vadd.f32 %v342, %v656
        %658 = vmatmul.bf16.gmra.mxu0 %v460
        %v659 = vpop.f32.mrf.mxu0
        %v660 = vadd.f32 %v342, %v659
        %v661 = vpop.f32.mrf.mxu0
        %v662 = vadd.f32 %v342, %v661
        %663 = vmatmul.bf16.gmra.mxu0 %v462
        %v664 = vpop.f32.mrf.mxu0
        %v665 = vadd.f32 %v342, %v664
        %v666 = vpop.f32.mrf.mxu0
        %v667 = vadd.f32 %v342, %v666
        %668 = vmatmul.bf16.gmra.mxu0 %v464
        %v669 = vpop.f32.mrf.mxu0
        %v670 = vadd.f32 %v342, %v669
        %v671 = vpop.f32.mrf.mxu0
        %v672 = vadd.f32 %v342, %v671
        %673 = vmatmul.bf16.gmra.mxu0 %v466
        %v674 = vpop.f32.mrf.mxu0
        %v675 = vadd.f32 %v342, %v674
        %v676 = vpop.f32.mrf.mxu0
        %v677 = vadd.f32 %v342, %v676
        %678 = vmatmul.bf16.gmra.mxu0 %v468
        %v679 = vpop.f32.mrf.mxu0
        %v680 = vadd.f32 %v342, %v679
        %v681 = vpop.f32.mrf.mxu0
        %v682 = vadd.f32 %v342, %v681
        %683 = vmatmul.bf16.gmra.mxu0 %v470
        %v684 = vpop.f32.mrf.mxu0
        %v685 = vadd.f32 %v342, %v684
        %v686 = vpop.f32.mrf.mxu0
        %v687 = vadd.f32 %v342, %v686
        %688 = vdwg.mxu0
        %689 = vmatpush.bf16.msra.mxu0 %v583
        %690 = vmatpush.bf16.msra.mxu0 %v582
        %691 = vmatpush.bf16.msra.mxu0 %v581
        %692 = vmatpush.bf16.msra.mxu0 %v580
        %693 = vmatpush.bf16.msra.mxu0 %v579
        %694 = vmatpush.bf16.msra.mxu0 %v578
        %695 = vmatpush.bf16.msra.mxu0 %v577
        %696 = vmatpush.bf16.msra.mxu0 %v576
        %697 = vmatmul.bf16.gmra.mxu0 %v441
        %v698 = vpop.f32.mrf.mxu0
        %v699 = vadd.f32 %v610, %v698
        %v700 = vpop.f32.mrf.mxu0
        %v701 = vadd.f32 %v612, %v700
        %702 = vmatmul.bf16.gmra.mxu0 %v443
        %v703 = vpop.f32.mrf.mxu0
        %v704 = vadd.f32 %v615, %v703
        %v705 = vpop.f32.mrf.mxu0
        %v706 = vadd.f32 %v617, %v705
        %707 = vmatmul.bf16.gmra.mxu0 %v445
        %v708 = vpop.f32.mrf.mxu0
        %v709 = vadd.f32 %v620, %v708
        %v710 = vpop.f32.mrf.mxu0
        %v711 = vadd.f32 %v622, %v710
        %712 = vmatmul.bf16.gmra.mxu0 %v447
        %v713 = vpop.f32.mrf.mxu0
        %v714 = vadd.f32 %v625, %v713
        %v715 = vpop.f32.mrf.mxu0
        %v716 = vadd.f32 %v627, %v715
        %717 = vmatmul.bf16.gmra.mxu0 %v449
        %v718 = vpop.f32.mrf.mxu0
        %v719 = vadd.f32 %v630, %v718
        %v720 = vpop.f32.mrf.mxu0
        %v721 = vadd.f32 %v632, %v720
        %722 = vmatmul.bf16.gmra.mxu0 %v451
        %v723 = vpop.f32.mrf.mxu0
        %v724 = vadd.f32 %v635, %v723
        %v725 = vpop.f32.mrf.mxu0
        %v726 = vadd.f32 %v637, %v725
        %727 = vmatmul.bf16.gmra.mxu0 %v453
        %v728 = vpop.f32.mrf.mxu0
        %v729 = vadd.f32 %v640, %v728
        %v730 = vpop.f32.mrf.mxu0
        %v731 = vadd.f32 %v642, %v730
        %732 = vmatmul.bf16.gmra.mxu0 %v455
        %v733 = vpop.f32.mrf.mxu0
        %v734 = vadd.f32 %v645, %v733
        %v735 = vpop.f32.mrf.mxu0
        %v736 = vadd.f32 %v647, %v735
        %737 = vmatmul.bf16.gmra.mxu0 %v457
        %v738 = vpop.f32.mrf.mxu0
        %v739 = vadd.f32 %v650, %v738
        %v740 = vpop.f32.mrf.mxu0
        %v741 = vadd.f32 %v652, %v740
        %742 = vmatmul.bf16.gmra.mxu0 %v459
        %v743 = vpop.f32.mrf.mxu0
        %v744 = vadd.f32 %v655, %v743
        %v745 = vpop.f32.mrf.mxu0
        %v746 = vadd.f32 %v657, %v745
        %747 = vmatmul.bf16.gmra.mxu0 %v461
        %v748 = vpop.f32.mrf.mxu0
        %v749 = vadd.f32 %v660, %v748
        %v750 = vpop.f32.mrf.mxu0
        %v751 = vadd.f32 %v662, %v750
        %752 = vmatmul.bf16.gmra.mxu0 %v463
        %v753 = vpop.f32.mrf.mxu0
        %v754 = vadd.f32 %v665, %v753
        %v755 = vpop.f32.mrf.mxu0
        %v756 = vadd.f32 %v667, %v755
        %757 = vmatmul.bf16.gmra.mxu0 %v465
        %v758 = vpop.f32.mrf.mxu0
        %v759 = vadd.f32 %v670, %v758
        %v760 = vpop.f32.mrf.mxu0
        %v761 = vadd.f32 %v672, %v760
        %762 = vmatmul.bf16.gmra.mxu0 %v467
        %v763 = vpop.f32.mrf.mxu0
        %v764 = vadd.f32 %v675, %v763
        %v765 = vpop.f32.mrf.mxu0
        %v766 = vadd.f32 %v677, %v765
        %767 = vmatmul.bf16.gmra.mxu0 %v469
        %v768 = vpop.f32.mrf.mxu0
        %v769 = vadd.f32 %v680, %v768
        %v770 = vpop.f32.mrf.mxu0
        %v771 = vadd.f32 %v682, %v770
        %772 = vmatmul.bf16.gmra.mxu0 %v471
        %v773 = vpop.f32.mrf.mxu0
        %v774 = vadd.f32 %v685, %v773
        %v775 = vpop.f32.mrf.mxu0
        %v776 = vadd.f32 %v687, %v775
        %777 = vdwg.mxu0
        %v778 = vld [vmem:[%s273] sm:$0xff]
        %v779 = vld [vmem:[%s273 + $0x8] sm:$0xff]
        %v780 = vld [vmem:[%s273 + $0x10] sm:$0xff]
        %v781 = vld [vmem:[%s273 + $0x18] sm:$0xff]
        %v782 = vld [vmem:[%s273 + $0x20] sm:$0xff]
        %v783 = vld [vmem:[%s273 + $0x28] sm:$0xff]
        %v784 = vld [vmem:[%s273 + $0x30] sm:$0xff]
        %v785 = vld [vmem:[%s273 + $0x38] sm:$0xff]
        %v786 = vld [vmem:[%s273 + $0x40] sm:$0xff]
        %v787 = vld [vmem:[%s273 + $0x48] sm:$0xff]
        %v788 = vld [vmem:[%s273 + $0x50] sm:$0xff]
        %v789 = vld [vmem:[%s273 + $0x58] sm:$0xff]
        %v790 = vld [vmem:[%s273 + $0x60] sm:$0xff]
        %v791 = vld [vmem:[%s273 + $0x68] sm:$0xff]
        %v792 = vld [vmem:[%s273 + $0x70] sm:$0xff]
        %v793 = vld [vmem:[%s273 + $0x78] sm:$0xff]
        %v794 = vld [vmem:[%s273 + $0x80] sm:$0xff]
        %v795 = vld [vmem:[%s273 + $0x88] sm:$0xff]
        %v796 = vld [vmem:[%s273 + $0x90] sm:$0xff]
        %v797 = vld [vmem:[%s273 + $0x98] sm:$0xff]
        %v798 = vld [vmem:[%s273 + $0xa0] sm:$0xff]
        %v799 = vld [vmem:[%s273 + $0xa8] sm:$0xff]
        %v800 = vld [vmem:[%s273 + $0xb0] sm:$0xff]
        %v801 = vld [vmem:[%s273 + $0xb8] sm:$0xff]
        %v802 = vld [vmem:[%s273 + $0xc0] sm:$0xff]
        %v803 = vld [vmem:[%s273 + $0xc8] sm:$0xff]
        %v804 = vld [vmem:[%s273 + $0xd0] sm:$0xff]
        %v805 = vld [vmem:[%s273 + $0xd8] sm:$0xff]
        %v806 = vld [vmem:[%s273 + $0xe0] sm:$0xff]
        %v807 = vld [vmem:[%s273 + $0xe8] sm:$0xff]
        %v808 = vld [vmem:[%s273 + $0xf0] sm:$0xff]
        %v809 = vld [vmem:[%s273 + $0xf8] sm:$0xff]
        %811 = vset.pattern.permute.xlu0 0
        %812 = vperm.xlu0 %811, %v778
        %v813 = vpop.permute.xlu0 %812
        %816 = vset.pattern.permute.xlu0 0
        %817 = vperm.xlu0 %816, %v779
        %v818 = vpop.permute.xlu0 %817
        %821 = vset.pattern.permute.xlu0 0
        %822 = vperm.xlu0 %821, %v780
        %v823 = vpop.permute.xlu0 %822
        %826 = vset.pattern.permute.xlu0 0
        %827 = vperm.xlu0 %826, %v781
        %v828 = vpop.permute.xlu0 %827
        %831 = vset.pattern.permute.xlu0 0
        %832 = vperm.xlu0 %831, %v782
        %v833 = vpop.permute.xlu0 %832
        %836 = vset.pattern.permute.xlu0 0
        %837 = vperm.xlu0 %836, %v783
        %v838 = vpop.permute.xlu0 %837
        %841 = vset.pattern.permute.xlu0 0
        %842 = vperm.xlu0 %841, %v784
        %v843 = vpop.permute.xlu0 %842
        %846 = vset.pattern.permute.xlu0 0
        %847 = vperm.xlu0 %846, %v785
        %v848 = vpop.permute.xlu0 %847
        %851 = vset.pattern.permute.xlu0 0
        %852 = vperm.xlu0 %851, %v786
        %v853 = vpop.permute.xlu0 %852
        %856 = vset.pattern.permute.xlu0 0
        %857 = vperm.xlu0 %856, %v787
        %v858 = vpop.permute.xlu0 %857
        %861 = vset.pattern.permute.xlu0 0
        %862 = vperm.xlu0 %861, %v788
        %v863 = vpop.permute.xlu0 %862
        %866 = vset.pattern.permute.xlu0 0
        %867 = vperm.xlu0 %866, %v789
        %v868 = vpop.permute.xlu0 %867
        %871 = vset.pattern.permute.xlu0 0
        %872 = vperm.xlu0 %871, %v790
        %v873 = vpop.permute.xlu0 %872
        %876 = vset.pattern.permute.xlu0 0
        %877 = vperm.xlu0 %876, %v791
        %v878 = vpop.permute.xlu0 %877
        %881 = vset.pattern.permute.xlu0 0
        %882 = vperm.xlu0 %881, %v792
        %v883 = vpop.permute.xlu0 %882
        %886 = vset.pattern.permute.xlu0 0
        %887 = vperm.xlu0 %886, %v793
        %v888 = vpop.permute.xlu0 %887
        %891 = vset.pattern.permute.xlu0 0
        %892 = vperm.xlu0 %891, %v794
        %v893 = vpop.permute.xlu0 %892
        %896 = vset.pattern.permute.xlu0 0
        %897 = vperm.xlu0 %896, %v795
        %v898 = vpop.permute.xlu0 %897
        %901 = vset.pattern.permute.xlu0 0
        %902 = vperm.xlu0 %901, %v796
        %v903 = vpop.permute.xlu0 %902
        %906 = vset.pattern.permute.xlu0 0
        %907 = vperm.xlu0 %906, %v797
        %v908 = vpop.permute.xlu0 %907
        %911 = vset.pattern.permute.xlu0 0
        %912 = vperm.xlu0 %911, %v798
        %v913 = vpop.permute.xlu0 %912
        %916 = vset.pattern.permute.xlu0 0
        %917 = vperm.xlu0 %916, %v799
        %v918 = vpop.permute.xlu0 %917
        %921 = vset.pattern.permute.xlu0 0
        %922 = vperm.xlu0 %921, %v800
        %v923 = vpop.permute.xlu0 %922
        %926 = vset.pattern.permute.xlu0 0
        %927 = vperm.xlu0 %926, %v801
        %v928 = vpop.permute.xlu0 %927
        %931 = vset.pattern.permute.xlu0 0
        %932 = vperm.xlu0 %931, %v802
        %v933 = vpop.permute.xlu0 %932
        %936 = vset.pattern.permute.xlu0 0
        %937 = vperm.xlu0 %936, %v803
        %v938 = vpop.permute.xlu0 %937
        %941 = vset.pattern.permute.xlu0 0
        %942 = vperm.xlu0 %941, %v804
        %v943 = vpop.permute.xlu0 %942
        %946 = vset.pattern.permute.xlu0 0
        %947 = vperm.xlu0 %946, %v805
        %v948 = vpop.permute.xlu0 %947
        %951 = vset.pattern.permute.xlu0 0
        %952 = vperm.xlu0 %951, %v806
        %v953 = vpop.permute.xlu0 %952
        %956 = vset.pattern.permute.xlu0 0
        %957 = vperm.xlu0 %956, %v807
        %v958 = vpop.permute.xlu0 %957
        %961 = vset.pattern.permute.xlu0 0
        %962 = vperm.xlu0 %961, %v808
        %v963 = vpop.permute.xlu0 %962
        %966 = vset.pattern.permute.xlu0 0
        %967 = vperm.xlu0 %966, %v809
        %v968 = vpop.permute.xlu0 %967
        %v970 = vmul.f32 %v699, %v813
        %v971 = vmul.f32 %v701, %v818
        %v972 = vmul.f32 %v704, %v823
        %v973 = vmul.f32 %v706, %v828
        %v974 = vmul.f32 %v709, %v833
        %v975 = vmul.f32 %v711, %v838
        %v976 = vmul.f32 %v714, %v843
        %v977 = vmul.f32 %v716, %v848
        %v978 = vmul.f32 %v719, %v853
        %v979 = vmul.f32 %v721, %v858
        %v980 = vmul.f32 %v724, %v863
        %v981 = vmul.f32 %v726, %v868
        %v982 = vmul.f32 %v729, %v873
        %v983 = vmul.f32 %v731, %v878
        %v984 = vmul.f32 %v734, %v883
        %v985 = vmul.f32 %v736, %v888
        %v986 = vmul.f32 %v739, %v893
        %v987 = vmul.f32 %v741, %v898
        %v988 = vmul.f32 %v744, %v903
        %v989 = vmul.f32 %v746, %v908
        %v990 = vmul.f32 %v749, %v913
        %v991 = vmul.f32 %v751, %v918
        %v992 = vmul.f32 %v754, %v923
        %v993 = vmul.f32 %v756, %v928
        %v994 = vmul.f32 %v759, %v933
        %v995 = vmul.f32 %v761, %v938
        %v996 = vmul.f32 %v764, %v943
        %v997 = vmul.f32 %v766, %v948
        %v998 = vmul.f32 %v769, %v953
        %v999 = vmul.f32 %v771, %v958
        %v1000 = vmul.f32 %v774, %v963
        %v1001 = vmul.f32 %v776, %v968
        %1002 = vst [vmem:[%s258] sm:$0xff] %v970
        %1003 = vst [vmem:[%s258 + $0x8] sm:$0xff] %v971
        %1004 = vst [vmem:[%s258 + $0x10] sm:$0xff] %v972
        %1005 = vst [vmem:[%s258 + $0x18] sm:$0xff] %v973
        %1006 = vst [vmem:[%s258 + $0x20] sm:$0xff] %v974
        %1007 = vst [vmem:[%s258 + $0x28] sm:$0xff] %v975
        %1008 = vst [vmem:[%s258 + $0x30] sm:$0xff] %v976
        %1009 = vst [vmem:[%s258 + $0x38] sm:$0xff] %v977
        %1010 = vst [vmem:[%s258 + $0x40] sm:$0xff] %v978
        %1011 = vst [vmem:[%s258 + $0x48] sm:$0xff] %v979
        %1012 = vst [vmem:[%s258 + $0x50] sm:$0xff] %v980
        %1013 = vst [vmem:[%s258 + $0x58] sm:$0xff] %v981
        %1014 = vst [vmem:[%s258 + $0x60] sm:$0xff] %v982
        %1015 = vst [vmem:[%s258 + $0x68] sm:$0xff] %v983
        %1016 = vst [vmem:[%s258 + $0x70] sm:$0xff] %v984
        %1017 = vst [vmem:[%s258 + $0x78] sm:$0xff] %v985
        %1018 = vst [vmem:[%s258 + $0x80] sm:$0xff] %v986
        %1019 = vst [vmem:[%s258 + $0x88] sm:$0xff] %v987
        %1020 = vst [vmem:[%s258 + $0x90] sm:$0xff] %v988
        %1021 = vst [vmem:[%s258 + $0x98] sm:$0xff] %v989
        %1022 = vst [vmem:[%s258 + $0xa0] sm:$0xff] %v990
        %1023 = vst [vmem:[%s258 + $0xa8] sm:$0xff] %v991
        %1024 = vst [vmem:[%s258 + $0xb0] sm:$0xff] %v992
        %1025 = vst [vmem:[%s258 + $0xb8] sm:$0xff] %v993
        %1026 = vst [vmem:[%s258 + $0xc0] sm:$0xff] %v994
        %1027 = vst [vmem:[%s258 + $0xc8] sm:$0xff] %v995
        %1028 = vst [vmem:[%s258 + $0xd0] sm:$0xff] %v996
        %1029 = vst [vmem:[%s258 + $0xd8] sm:$0xff] %v997
        %1030 = vst [vmem:[%s258 + $0xe0] sm:$0xff] %v998
        %1031 = vst [vmem:[%s258 + $0xe8] sm:$0xff] %v999
        %1032 = vst [vmem:[%s258 + $0xf0] sm:$0xff] %v1000
        %1033 = vst [vmem:[%s258 + $0xf8] sm:$0xff] %v1001
        %s1034 = sand.u32 %s145, 1
        %s1035 = scalar_lea.sflag [#allocation4], %s1034
        %s1036 = sand.u32 %s145, 1
        %s1037 = smul.addr %s1036, 256
        %s1038 = scalar_lea.vmem [#allocation5], %s1037
        // Predicated region
        $region41: #{tpu_custom_call.1} parent=35 // pred_check
          %p1039 = pneg %p155
        $region42: #{tpu_custom_call.1} parent=35 // pred_check_branch
          %1041 = sbr.rel (%p1039) target = $region44
        $region43: #{tpu_custom_call.1} parent=35 // pred_region
          %s1042 = smul.u32 32, %s23
          %1044 = vsyncadd %s1035, 0
          %s1045 = sadd.s32 %s24, %s1042
          %s1046 = smul.addr %s1045, 8
          %s1047 = scalar_lea.hbm %s4, %s1046
          %s1048 = sshll.u32 %s1038, 4
          %s1049 = int_to_ptr.vmem [resolvable:$true] %s1048
          %s1050 = sshll.u32 %s1047, 4
          %s1051 = int_to_ptr.hbm [resolvable:$true] %s1050
          %1056 = dma.vmem_to_hbm [thread:$0]  %s1049, 4096, %s1051, %s1035, 128, 128, 8
        $region44: #{tpu_custom_call.1} parent=35 // pred_fallthru
          _
      $region36: #{tpu_custom_call.1} parent=5 // pred_fallthru
        _
      %p1057 = scmp.le.s32.totalorder 2, %s14
      // Predicated region
      $region45: #{tpu_custom_call.1} parent=5 // pred_check
        %p1058 = pneg %p1057
      $region46: #{tpu_custom_call.1} parent=5 // pred_check_branch
        %1060 = sbr.rel (%p1058) target = $region48
      $region47: #{tpu_custom_call.1} parent=5 // pred_region
        %s1061 = ssub.s32 %s14, 2
        // Predicated region
        $region49: #{tpu_custom_call.1} parent=47 // pred_check
          %p1062 = pneg %p161
        $region50: #{tpu_custom_call.1} parent=47 // pred_check_branch
          %1064 = sbr.rel (%p1062) target = $region52
        $region51: #{tpu_custom_call.1} parent=47 // pred_region
          %s1065 = sand.u32 %s146, 1
          %s1066 = scalar_lea.sflag [#allocation4], %s1065
          %s1067 = sand.u32 %s146, 1
          %s1068 = smul.addr %s1067, 256
          %s1069 = scalar_lea.vmem [#allocation5], %s1068
          %1071 = dma.done %s1066, 4096
        $region52: #{tpu_custom_call.1} parent=47 // pred_fallthru
          _
      $region48: #{tpu_custom_call.1} parent=5 // pred_fallthru
        _
    $region6: #{tpu_custom_call.1} parent=1 // loop_footer
      %s18 = sadd.s32 1, %s14
    $region7: #{tpu_custom_call.1} parent=1 // loop_footer_branch
      %13 = sbr.rel target = $region3
    $region8: #{tpu_custom_call.1} parent=1 // loop_exit
      _
    %1072 = vsyncpa [#allocation3], 1
    %s1073 = scalar_lea.sflag [#allocation3], 1
    %1074 = vsyncpa %s1073, 1
    %1075 = vsyncpa [#allocation4], 1
    %s1076 = scalar_lea.sflag [#allocation4], 1
    %1077 = vsyncpa %s1076, 1

</llo_original>
